<compile_context>
chip_gen: v7x
topology: tpu7x:2x2x1
jax: 0.10.0
libtpu: 0.0.40
codegen_flags: <defaults>
</compile_context>

<pallas_src>
import jax
import jax.numpy as jnp
from jax.experimental import pallas as pl
from jax.experimental.pallas import tpu as pltpu

_LANE = 128
_MiB = 1 << 20


# --------------------------- hardware budgets ------------------------------ #

def _vmem_capacity_bytes():
    try:
        return int(pltpu.get_tpu_info().vmem_capacity_bytes)
    except Exception:
        return 64 * _MiB            # conservative (v7x-sized) fallback


def _vmem_limit_bytes(cap):
    # >=8 MiB headroom for compiler-internal scratch; 112 MiB on 128 MiB parts,
    # 56 MiB on 64 MiB (v7x) parts.
    return int(max(32 * _MiB, min(cap - 8 * _MiB, 112 * _MiB)))


# ----------------------------- kernels ------------------------------------- #

def _sum_kernel(x1_ref, x2_ref, o_ref):
    o_ref[...] = x1_ref[...] + x2_ref[...]


def _diff_kernel(x1_ref, x2_ref, o_ref):
    o_ref[...] = jnp.abs(x1_ref[...] - x2_ref[...])


def _concat_dma_kernel(x1_hbm, x2_hbm, o_hbm, sem):
    # Pure data movement: direct HBM->HBM DMA of this batch's two channel
    # halves -- no VMEM staging, no vld/vst traffic, no double-buffer footprint.
    b = pl.program_id(0)
    cp1 = pltpu.make_async_copy(x1_hbm.at[b], o_hbm.at[b, 0], sem.at[0])
    cp2 = pltpu.make_async_copy(x2_hbm.at[b], o_hbm.at[b, 1], sem.at[1])
    cp1.start()
    cp2.start()
    cp1.wait()
    cp2.wait()


# --------------------------- tiling helpers -------------------------------- #

def _pick_lane_width(total, quantum):
    """Largest multiple-of-128 width dividing `total`, preferring widths whose
    row count is a multiple of the dtype-aware sublane quantum.  None if
    `total` is not divisible by 128."""
    best = None
    for k in (2048, 1024, 512, 256, 128):
        if total % k == 0:
            if best is None:
                best = k
            if (total // k) % quantum == 0:
                return k
    return best


def _pick_tile_rows(rows, k, itemsize, per_buf_bytes, quantum):
    """Row-tile size: as large as the per-buffer VMEM budget allows (a ragged
    final block is fine -- Pallas masks it).  If the whole problem would fit in
    one tile, split into >=2 grid steps so both v7x TensorCores get work."""
    cap = (per_buf_bytes // (k * itemsize)) // quantum * quantum
    cap = max(quantum, cap)
    if rows <= cap:
        if rows >= 2 * quantum:
            half = (rows + 1) // 2
            half = (half + quantum - 1) // quantum * quantum
            return min(half, rows)
        return rows                  # full extent: always a legal block shape
    return cap                       # ragged last tile handled by masking


# ----------------------------- wrappers ------------------------------------ #

def _elementwise(kernel, xla_op, x1, x2):
    """sum / diff on a lane-dense (rows, K) view of the flattened tensors."""
    orig_shape = x1.shape
    total = x1.size
    if total == 0:
        return xla_op(x1, x2)
    itemsize = jnp.dtype(x1.dtype).itemsize
    quantum = 8 * max(1, 4 // itemsize)          # sublane rows incl. packing
    k = _pick_lane_width(total, quantum)
    if k is None:
        # Element count not 128-divisible.  This op is pure HBM streaming;
        # padding or prefix-slicing would add a full extra HBM round trip,
        # so hand these (rare) shapes straight to XLA.
        return xla_op(x1, x2)

    rows = total // k
    cap = _vmem_capacity_bytes()
    per_buf = max(2 * _MiB, cap // 12)           # 2 in + 1 out, double-buffered
    tile_r = _pick_tile_rows(rows, k, itemsize, per_buf, quantum)

    a = x1.reshape(rows, k)
    b = x2.reshape(rows, k)

    out = pl.pallas_call(
        kernel,
        out_shape=jax.ShapeDtypeStruct((rows, k), x1.dtype),
        grid=(pl.cdiv(rows, tile_r),),
        in_specs=[pl.BlockSpec((tile_r, k), lambda i: (i, 0)),
                  pl.BlockSpec((tile_r, k), lambda i: (i, 0))],
        out_specs=pl.BlockSpec((tile_r, k), lambda i: (i, 0)),
        compiler_params=pltpu.CompilerParams(
            dimension_semantics=("parallel",),
            vmem_limit_bytes=_vmem_limit_bytes(cap),
        ),
    )(a, b)
    return out.reshape(orig_shape)


def _concat_channels(x1, x2):
    """Channel concat as direct HBM->HBM DMA into an (N, 2, C*H*W) output."""
    n, c, h, w = x1.shape
    chw = c * h * w
    a = x1.reshape(n, chw)
    b = x2.reshape(n, chw)

    out = pl.pallas_call(
        _concat_dma_kernel,
        out_shape=jax.ShapeDtypeStruct((n, 2, chw), x1.dtype),
        grid=(n,),
        in_specs=[pl.BlockSpec(memory_space=pl.ANY),
                  pl.BlockSpec(memory_space=pl.ANY)],
        out_specs=pl.BlockSpec(memory_space=pl.ANY),
        scratch_shapes=[pltpu.SemaphoreType.DMA((2,))],
        compiler_params=pltpu.CompilerParams(
            dimension_semantics=("arbitrary",),
        ),
    )(a, b)
    return out.reshape(n, 2 * c, h, w)


def feature_fusion(x1, x2, fusion_type="concat"):
    assert x1.shape == x2.shape and x1.dtype == x2.dtype
    if fusion_type == "sum":
        return _elementwise(_sum_kernel, jnp.add, x1, x2)
    if fusion_type == "diff":
        return _elementwise(_diff_kernel, lambda a, b: jnp.abs(a - b), x1, x2)
    if fusion_type == "concat":
        return _concat_channels(x1, x2)
    raise ValueError(f"unknown fusion_type: {fusion_type}")


# ------------------------------- main -------------------------------------- #

if __name__ == "__main__":
    key = jax.random.PRNGKey(0)
    k1, k2 = jax.random.split(key)

    N, C, H, W = 2, 4, 16, 16
    x1 = jax.random.normal(k1, (N, C, H, W), dtype=jnp.float32)
    x2 = jax.random.normal(k2, (N, C, H, W), dtype=jnp.float32)

    # 'concat' (module default)
    out_cat = jax.block_until_ready(feature_fusion(x1, x2, "concat"))
    assert out_cat.shape == (N, 2 * C, H, W)
    assert jnp.allclose(out_cat, jnp.concatenate([x1, x2], axis=1))

    # 'sum'
    out_sum = jax.block_until_ready(feature_fusion(x1, x2, "sum"))
    assert jnp.allclose(out_sum, x1 + x2)

    # 'diff'
    out_diff = jax.block_until_ready(feature_fusion(x1, x2, "diff"))
    assert jnp.allclose(out_diff, jnp.abs(x1 - x2))

    print("KERNEL_OK")
</pallas_src>

<mosaic_0001>
module attributes {stable_mosaic.version = 11 : i64} {
  func.func @_concat_dma_kernel(%arg0: i32, %arg1: memref<2x1024xf32, #tpu.memory_space<any>>, %arg2: memref<2x1024xf32, #tpu.memory_space<any>>, %arg3: memref<2x2x1024xf32, #tpu.memory_space<any>>, %arg4: memref<2x!tpu.dma_semaphore, #tpu.memory_space<semaphore_mem>>) attributes {dimension_semantics = [#tpu.dimension_semantics<arbitrary>], iteration_bounds = array<i64: 2>, scalar_prefetch = 0 : i64, scratch_operands = 1 : i64, tpu.core_type = #tpu.core_type<tc>, window_params = [{}, {}, {}]} {
    %c0_i32 = arith.constant 0 : i32
    %c0_i32_0 = arith.constant 0 : i32
    %c0_i32_1 = arith.constant 0 : i32
    %0 = tpu.memref_slice %arg1[%arg0, %c0_i32_1] : memref<2x1024xf32, #tpu.memory_space<any>> -> memref<1x1024xf32, #tpu.memory_space<any>>
    %1 = tpu.memref_squeeze %0 : memref<1x1024xf32, #tpu.memory_space<any>> -> memref<1024xf32, #tpu.memory_space<any>>
    %c0_i32_2 = arith.constant 0 : i32
    %2 = tpu.memref_slice %arg3[%arg0, %c0_i32, %c0_i32_2] : memref<2x2x1024xf32, #tpu.memory_space<any>> -> memref<1x1x1024xf32, #tpu.memory_space<any>>
    %3 = tpu.memref_squeeze %2 : memref<1x1x1024xf32, #tpu.memory_space<any>> -> memref<1024xf32, #tpu.memory_space<any>>
    %4 = tpu.memref_slice %arg4[%c0_i32_0] : memref<2x!tpu.dma_semaphore, #tpu.memory_space<semaphore_mem>> -> memref<1x!tpu.dma_semaphore, #tpu.memory_space<semaphore_mem>>
    %5 = tpu.memref_squeeze %4 : memref<1x!tpu.dma_semaphore, #tpu.memory_space<semaphore_mem>> -> memref<!tpu.dma_semaphore, #tpu.memory_space<semaphore_mem>>
    tpu.enqueue_dma source(%1 : memref<1024xf32, #tpu.memory_space<any>>) target(%3 : memref<1024xf32, #tpu.memory_space<any>>) target_semaphore(%5 : memref<!tpu.dma_semaphore, #tpu.memory_space<semaphore_mem>>)
    %c1_i32 = arith.constant 1 : i32
    %c1_i32_3 = arith.constant 1 : i32
    %c0_i32_4 = arith.constant 0 : i32
    %6 = tpu.memref_slice %arg2[%arg0, %c0_i32_4] : memref<2x1024xf32, #tpu.memory_space<any>> -> memref<1x1024xf32, #tpu.memory_space<any>>
    %7 = tpu.memref_squeeze %6 : memref<1x1024xf32, #tpu.memory_space<any>> -> memref<1024xf32, #tpu.memory_space<any>>
    %c0_i32_5 = arith.constant 0 : i32
    %8 = tpu.memref_slice %arg3[%arg0, %c1_i32, %c0_i32_5] : memref<2x2x1024xf32, #tpu.memory_space<any>> -> memref<1x1x1024xf32, #tpu.memory_space<any>>
    %9 = tpu.memref_squeeze %8 : memref<1x1x1024xf32, #tpu.memory_space<any>> -> memref<1024xf32, #tpu.memory_space<any>>
    %10 = tpu.memref_slice %arg4[%c1_i32_3] : memref<2x!tpu.dma_semaphore, #tpu.memory_space<semaphore_mem>> -> memref<1x!tpu.dma_semaphore, #tpu.memory_space<semaphore_mem>>
    %11 = tpu.memref_squeeze %10 : memref<1x!tpu.dma_semaphore, #tpu.memory_space<semaphore_mem>> -> memref<!tpu.dma_semaphore, #tpu.memory_space<semaphore_mem>>
    tpu.enqueue_dma source(%7 : memref<1024xf32, #tpu.memory_space<any>>) target(%9 : memref<1024xf32, #tpu.memory_space<any>>) target_semaphore(%11 : memref<!tpu.dma_semaphore, #tpu.memory_space<semaphore_mem>>)
    %c0_i32_6 = arith.constant 0 : i32
    %c0_i32_7 = arith.constant 0 : i32
    %c0_i32_8 = arith.constant 0 : i32
    %12 = tpu.memref_slice %arg1[%arg0, %c0_i32_8] : memref<2x1024xf32, #tpu.memory_space<any>> -> memref<1x1024xf32, #tpu.memory_space<any>>
    %13 = tpu.memref_squeeze %12 : memref<1x1024xf32, #tpu.memory_space<any>> -> memref<1024xf32, #tpu.memory_space<any>>
    %c0_i32_9 = arith.constant 0 : i32
    %14 = tpu.memref_slice %arg3[%arg0, %c0_i32_6, %c0_i32_9] : memref<2x2x1024xf32, #tpu.memory_space<any>> -> memref<1x1x1024xf32, #tpu.memory_space<any>>
    %15 = tpu.memref_squeeze %14 : memref<1x1x1024xf32, #tpu.memory_space<any>> -> memref<1024xf32, #tpu.memory_space<any>>
    %16 = tpu.memref_slice %arg4[%c0_i32_7] : memref<2x!tpu.dma_semaphore, #tpu.memory_space<semaphore_mem>> -> memref<1x!tpu.dma_semaphore, #tpu.memory_space<semaphore_mem>>
    %17 = tpu.memref_squeeze %16 : memref<1x!tpu.dma_semaphore, #tpu.memory_space<semaphore_mem>> -> memref<!tpu.dma_semaphore, #tpu.memory_space<semaphore_mem>>
    tpu.wait_dma2 semaphore(%17 : memref<!tpu.dma_semaphore, #tpu.memory_space<semaphore_mem>>) src(%13 : memref<1024xf32, #tpu.memory_space<any>>) dst(%15 : memref<1024xf32, #tpu.memory_space<any>>)
    %c1_i32_10 = arith.constant 1 : i32
    %c1_i32_11 = arith.constant 1 : i32
    %c0_i32_12 = arith.constant 0 : i32
    %18 = tpu.memref_slice %arg2[%arg0, %c0_i32_12] : memref<2x1024xf32, #tpu.memory_space<any>> -> memref<1x1024xf32, #tpu.memory_space<any>>
    %19 = tpu.memref_squeeze %18 : memref<1x1024xf32, #tpu.memory_space<any>> -> memref<1024xf32, #tpu.memory_space<any>>
    %c0_i32_13 = arith.constant 0 : i32
    %20 = tpu.memref_slice %arg3[%arg0, %c1_i32_10, %c0_i32_13] : memref<2x2x1024xf32, #tpu.memory_space<any>> -> memref<1x1x1024xf32, #tpu.memory_space<any>>
    %21 = tpu.memref_squeeze %20 : memref<1x1x1024xf32, #tpu.memory_space<any>> -> memref<1024xf32, #tpu.memory_space<any>>
    %22 = tpu.memref_slice %arg4[%c1_i32_11] : memref<2x!tpu.dma_semaphore, #tpu.memory_space<semaphore_mem>> -> memref<1x!tpu.dma_semaphore, #tpu.memory_space<semaphore_mem>>
    %23 = tpu.memref_squeeze %22 : memref<1x!tpu.dma_semaphore, #tpu.memory_space<semaphore_mem>> -> memref<!tpu.dma_semaphore, #tpu.memory_space<semaphore_mem>>
    tpu.wait_dma2 semaphore(%23 : memref<!tpu.dma_semaphore, #tpu.memory_space<semaphore_mem>>) src(%19 : memref<1024xf32, #tpu.memory_space<any>>) dst(%21 : memref<1024xf32, #tpu.memory_space<any>>)
    return
  }
}

</mosaic_0001>

<llo_original>
// kernel: tpu_custom_call.1
$region0: #{tpu_custom_call.1}
  #allocation0 [shape = 'u32[]', space=smem, size = 0x4, offset = 0x4, fixed_abs, tag = 'smem constant byte address 0x4 - core index']
  #allocation1 [shape = 'u32[144,128]{1,0:T(1,128)}', space=vmem, size = 0x12000, scoped, tag = 'internal scratch']
  #allocation2 [shape = 's32[2]{0}', space=sflag, size = 0x8, scoped, tag = 'scratch operand']
  #allocation3 [shape = 's32[]', space=sflag, size = 0x4, offset = 0, fixed_abs, tag = 'sflag constant byte address 0x0 - dummy sync flag']
  #allocation5 [shape = 's32[]', space=sflag, size = 0x4, offset = 0, fixed_abs, tag = 'sflag constant byte address 0x0 - dummy sync flag']
  %s0 = inlined_call_operand.hbm [shape: f32[2,1024], index: 0, kind: input, shape index: {}]
  %s1 = inlined_call_operand.hbm [shape: f32[2,1024], index: 1, kind: input, shape index: {}]
  %s2 = inlined_call_operand.hbm [shape: f32[2,2,1024], index: 2, kind: output, shape index: {}]
  %s3 = sld [smem:[#allocation0]]
  $region9: #{tpu_custom_call.1} parent=0
    _
  %s5 = ssub.s32 1, %s3
  %s6 = scalar_select 0, %s5, %s3
  loop: start=0, step=1, limit=2
  $region2: #{tpu_custom_call.1} parent=0 // loop_pre_header
    _
  $region3: #{tpu_custom_call.1} parent=0 // loop_header
    %s8 = sphi 0, %s12
    %p9 = scmp.ge.s32.totalorder %s8, 2
  $region4: #{tpu_custom_call.1} parent=0 // loop_header_branch
    %11 = sbr.rel (%p9) target = $region8
  $region5: #{tpu_custom_call.1} parent=0 // loop_body
    #allocation4 [shape = 'u32[3]{0}', space=smem, size = 0xc, scoped, tag = 'DMA stride descriptor']
    #allocation6 [shape = 'u32[3]{0}', space=smem, size = 0xc, scoped, tag = 'DMA stride descriptor']
    %s13 = sadd.s32 %s8, 1
    %s14 = sshrl.u32 %s8, 1
    %s15 = sand.u32 %s8, 1
    %s16 = smul.u32 %s14, 16
    %s17 = sadd.s32 %s15, %s16
    %s18 = smul.addr %s17, 16
    %s19 = scalar_lea.hbm %s0, %s18
    %s20 = smul.u32 %s8, 16
    %s21 = smul.addr %s20, 16
    %s22 = scalar_lea.hbm %s2, %s21
    %s24 = sshll.u32 1, 14
    %s25 = sxor.u32 4294967295, %s24
    %s28 = sshll.u32 3, 24
    %s29 = sxor.u32 4294967295, %s28
    %s30 = sand.u32 0, %s29
    %s32 = sor.u32 %s30, 0
    %35 = sst [smem:[#allocation4]] 32
    %s36 = scalar_lea.smem [#allocation4], 1
    %37 = sst [smem:[%s36]] 32
    %s38 = scalar_lea.smem [#allocation4], 2
    %39 = sst [smem:[%s38]] 1
    %41 = dma.general %s19, 128, %s22, [#allocation2], [#allocation3], [#allocation4], %s32, 0
    %s42 = smul.addr %s17, 16
    %s43 = scalar_lea.hbm %s1, %s42
    %s44 = sadd.s32 1, %s20
    %s45 = smul.addr %s44, 16
    %s46 = scalar_lea.hbm %s2, %s45
    %s47 = scalar_lea.sflag [#allocation2], 1
    %s49 = sshll.u32 1, 14
    %s50 = sxor.u32 4294967295, %s49
    %s53 = sshll.u32 3, 24
    %s54 = sxor.u32 4294967295, %s53
    %s55 = sand.u32 0, %s54
    %s57 = sor.u32 %s55, 0
    %60 = sst [smem:[#allocation6]] 32
    %s61 = scalar_lea.smem [#allocation6], 1
    %62 = sst [smem:[%s61]] 32
    %s63 = scalar_lea.smem [#allocation6], 2
    %64 = sst [smem:[%s63]] 1
    %66 = dma.general %s43, 128, %s46, %s47, [#allocation5], [#allocation6], %s57, 0
    %68 = dma.done [#allocation2], 128
    %70 = dma.done %s47, 128
  $region6: #{tpu_custom_call.1} parent=0 // loop_footer
    %s12 = sadd.s32 1, %s8
  $region7: #{tpu_custom_call.1} parent=0 // loop_footer_branch
    %7 = sbr.rel target = $region3
  $region8: #{tpu_custom_call.1} parent=0 // loop_exit
    _
  %71 = vsyncmov [#allocation2]
  %s72 = vpop.sfrf %71
  %p73 = scmp.eq.s32.totalorder %s72, 0
  %p74 = pneg %p73
  %76 = shalt.err (%p74)
  %s77 = scalar_lea.sflag [#allocation2], 1
  %78 = vsyncmov %s77
  %s79 = vpop.sfrf %78
  %p80 = scmp.eq.s32.totalorder %s79, 0
  %p81 = pneg %p80
  %83 = shalt.err (%p81)

</llo_original>
